<compile_context>
chip_gen: v7x
topology: tpu7x:2x2x1
jax: 0.10.0
libtpu: 0.0.40
codegen_flags: <defaults>
</compile_context>

<pallas_src>
import jax
import jax.numpy as jnp
from jax.experimental import pallas as pl
from jax.experimental.pallas import tpu as pltpu


def _listnet_tile_kernel(teacher_ref, student_ref, out_ref, acc_ref):
    """Processes one (TILE_R, N) row block; accumulates (sum(q*p), sum(q))."""
    i = pl.program_id(1)  # row-tile index inside this split (reduction axis)

    @pl.when(i == 0)
    def _init():
        acc_ref[0] = jnp.float32(0.0)  # running sum(q * p)
        acc_ref[1] = jnp.float32(0.0)  # running sum(q)  (== number of rows)

    t = teacher_ref[...].astype(jnp.float32)  # (TILE_R, N)
    s = student_ref[...].astype(jnp.float32)
    rows, cols = t.shape

    # Global row offset of this tile: block index = c * tiles_per_split + i.
    block_idx = pl.program_id(0) * pl.num_programs(1) + i
    row_ids = jax.lax.broadcasted_iota(jnp.int32, (rows, cols), 0) + block_idx * rows
    col_ids = jax.lax.broadcasted_iota(jnp.int32, (rows, cols), 1)
    diag = row_ids == col_ids

    # fill_diagonal_(-inf) on both matrices (diagonal excluded from softmax).
    neg_inf = jnp.float32(-jnp.inf)
    s = jnp.where(diag, neg_inf, s)
    t = jnp.where(diag, neg_inf, t)

    # p = log_softmax(student) along lanes (diagonal entries are -inf).
    s_shift = s - jnp.max(s, axis=-1, keepdims=True)
    p = s_shift - jnp.log(jnp.sum(jnp.exp(s_shift), axis=-1, keepdims=True))

    # Teacher softmax with the per-row denominator factored out of the
    # element-wise path: q * p == (t_exp * p) / t_sum  (one divide per row).
    t_exp = jnp.exp(t - jnp.max(t, axis=-1, keepdims=True))  # exactly 0 on the diagonal
    t_sum = jnp.sum(t_exp, axis=-1, keepdims=True)

    # Mask the diagonal of p instead of the NaN repair in the reference
    # (q_diag == 0, p_diag == -inf  ->  0 * -inf -> NaN -> nansum drops it).
    p_off = jnp.where(diag, jnp.float32(0.0), p)
    row_num = jnp.sum(t_exp * p_off, axis=-1, keepdims=True) / t_sum  # (TILE_R, 1)

    acc_ref[0] += jnp.sum(row_num)
    # Each softmax row sums to 1 (up to f32 rounding), so q.nansum() == #rows.
    acc_ref[1] += jnp.float32(rows)

    # The output block is resident across the reduction axis; keep it current.
    out_ref[0, 0, 0] = acc_ref[0]
    out_ref[0, 0, 1] = acc_ref[1]


def _pick_tile_r(n: int, max_f32_block_bytes: int = 2 << 20) -> int:
    """Largest row tile that divides n, is a multiple of 8 (sublane), and keeps
    one (tile, n) f32 block under the budget. Falls back to a single block if
    n is not a multiple of 8 (second-minor block dim must then equal n)."""
    if n % 8 != 0:
        return n
    best = 8
    for t in range(8, n + 1, 8):
        if n % t == 0 and t * n * 4 <= max_f32_block_bytes:
            best = t
    return best
    # TODO(synk): for N large enough that even an (8, N) f32 row block blows the
    # VMEM budget, add a column-tiled online-softmax (flash-style) variant.


def listnet_loss(teacher_top1_sim_pred, student_top1_sim_pred, gamma_,
                 *, tile_r=None, input_dtype=None):
    """Pallas wrapper. Inputs: (N, N) similarity matrices. Returns scalar loss."""
    teacher = teacher_top1_sim_pred
    student = student_top1_sim_pred
    assert teacher.shape == student.shape and teacher.ndim == 2
    n = teacher.shape[0]
    assert teacher.shape[1] == n, "ListNet expects square (N, N) similarity matrices"

    if input_dtype is not None:  # optional: halve HBM bytes (kernel upcasts to f32)
        teacher = teacher.astype(input_dtype)
        student = student.astype(input_dtype)

    if tile_r is None:
        tile_r = _pick_tile_r(n)
    assert n % tile_r == 0 and (tile_r % 8 == 0 or tile_r == n)

    num_tiles = n // tile_r
    # Split row tiles across v7x's two TensorCores; harmless (serial) on v5e/v6e.
    n_split = 2 if num_tiles % 2 == 0 else 1
    tiles_per_split = num_tiles // n_split

    itemsize = jnp.dtype(teacher.dtype).itemsize
    # 2 inputs x 2 pipeline buffers + headroom for the f32 per-tile temporaries.
    vmem_limit = int(min(48 << 20,
                         max(32 << 20,
                             4 * tile_r * n * itemsize
                             + 10 * tile_r * n * 4 + (2 << 20))))

    in_spec = pl.BlockSpec((tile_r, n), lambda c, i: (c * tiles_per_split + i, 0))
    partials = pl.pallas_call(
        _listnet_tile_kernel,
        out_shape=jax.ShapeDtypeStruct((n_split, 1, 2), jnp.float32),
        grid=(n_split, tiles_per_split),
        in_specs=[in_spec, in_spec],
        out_specs=pl.BlockSpec((1, 1, 2), lambda c, i: (c, 0, 0),
                               memory_space=pltpu.MemorySpace.SMEM),
        scratch_shapes=[pltpu.SMEM((2,), jnp.float32)],
        compiler_params=pltpu.CompilerParams(
            dimension_semantics=("parallel", "arbitrary"),
            vmem_limit_bytes=vmem_limit),
    )(teacher, student)

    num = jnp.sum(partials[:, 0, 0])   # sum over per-core partials of sum(q * p)
    den = jnp.sum(partials[:, 0, 1])   # sum over per-core partials of sum(q)
    # gamma_ stays outside the kernel (traced), so changing it never recompiles.
    return jnp.asarray(gamma_, jnp.float32) * (-num / den)


def _listnet_ref(teacher, student, gamma_):
    """Pure-JAX reference mirroring the PyTorch forward."""
    n = teacher.shape[0]
    diag = jnp.eye(n, dtype=bool)
    t = jnp.where(diag, -jnp.inf, teacher)
    s = jnp.where(diag, -jnp.inf, student)
    p = jax.nn.log_softmax(s, axis=-1)
    q = jax.nn.softmax(t, axis=-1)
    prod = q * p
    num = jnp.sum(jnp.where(jnp.isnan(prod), 0.0, prod))
    den = jnp.sum(jnp.where(jnp.isnan(q), 0.0, q))
    return gamma_ * (-num / den)


if __name__ == "__main__":
    # Deterministic hyperparameters (ListNet(tau, gamma_)); tau unused in forward.
    tau = 0.05      # kept to document the module signature
    gamma_ = 2.0

    key = jax.random.PRNGKey(0)
    # (N=8: single-tile path)  (N=256, tile_r=64: multi-tile + 2-way split path)
    for n, tile_r in ((8, None), (256, 64)):
        kt, ks = jax.random.split(jax.random.fold_in(key, n))
        teacher_sim = jax.random.normal(kt, (n, n), dtype=jnp.float32)
        student_sim = jax.random.normal(ks, (n, n), dtype=jnp.float32)

        loss = listnet_loss(teacher_sim, student_sim, gamma_, tile_r=tile_r)
        loss = jax.block_until_ready(loss)

        ref = _listnet_ref(teacher_sim, student_sim, gamma_)
        assert jnp.allclose(loss, ref, rtol=1e-5, atol=1e-5), (n, loss, ref)

    print("KERNEL_OK")
</pallas_src>

<mosaic_0001>
module attributes {stable_mosaic.version = 11 : i64} {
  func.func @_listnet_tile_kernel(%arg0: i32, %arg1: i32, %arg2: memref<8x8xf32, #tpu.memory_space<vmem>>, %arg3: memref<8x8xf32, #tpu.memory_space<vmem>>, %arg4: memref<1x1x2xf32, #tpu.memory_space<smem>>, %arg5: memref<2xf32, #tpu.memory_space<smem>>) attributes {dimension_semantics = [#tpu.dimension_semantics<parallel>, #tpu.dimension_semantics<arbitrary>], iteration_bounds = array<i64: 1, 1>, scalar_prefetch = 0 : i64, scratch_operands = 1 : i64, tpu.core_type = #tpu.core_type<tc>, window_params = [{transform_indices = @transform_0, window_bounds = array<i64: 8, 8>}, {transform_indices = @transform_1, window_bounds = array<i64: 8, 8>}, {transform_indices = @transform_2, window_bounds = array<i64: 1, 1, 2>}]} {
    %c0_i32 = arith.constant 0 : i32
    %0 = arith.cmpi eq, %arg1, %c0_i32 : i32
    %1 = arith.extui %0 : i1 to i32
    %c0_i32_0 = arith.constant 0 : i32
    %2 = arith.cmpi ne, %1, %c0_i32_0 : i32
    scf.if %2 {
      %cst_24 = arith.constant 0.000000e+00 : f32
      %c0_25 = arith.constant 0 : index
      %54 = memref.load %arg5[%c0_25] : memref<2xf32, #tpu.memory_space<smem>>
      memref.store %cst_24, %arg5[%c0_25] : memref<2xf32, #tpu.memory_space<smem>>
      %cst_26 = arith.constant 0.000000e+00 : f32
      %c1_27 = arith.constant 1 : index
      %55 = memref.load %arg5[%c1_27] : memref<2xf32, #tpu.memory_space<smem>>
      memref.store %cst_26, %arg5[%c1_27] : memref<2xf32, #tpu.memory_space<smem>>
    } else {
    }
    %c0 = arith.constant 0 : index
    %c0_1 = arith.constant 0 : index
    %3 = vector.load %arg2[%c0, %c0_1] : memref<8x8xf32, #tpu.memory_space<vmem>>, vector<8x8xf32>
    %c0_2 = arith.constant 0 : index
    %c0_3 = arith.constant 0 : index
    %4 = vector.load %arg3[%c0_2, %c0_3] : memref<8x8xf32, #tpu.memory_space<vmem>>, vector<8x8xf32>
    %c1_i32 = arith.constant 1 : i32
    %5 = arith.muli %arg0, %c1_i32 : i32
    %6 = arith.addi %5, %arg1 : i32
    %7 = tpu.iota {dimensions = array<i32: 0>} : vector<8x8xi32>
    %c8_i32 = arith.constant 8 : i32
    %8 = arith.muli %6, %c8_i32 : i32
    %9 = vector.broadcast %8 : i32 to vector<8x8xi32>
    %10 = arith.addi %7, %9 : vector<8x8xi32>
    %11 = tpu.iota {dimensions = array<i32: 1>} : vector<8x8xi32>
    %12 = arith.cmpi eq, %10, %11 : vector<8x8xi32>
    %cst = arith.constant 0xFF800000 : f32
    %13 = vector.broadcast %cst : f32 to vector<8x8xf32>
    %14 = arith.select %12, %13, %4 : vector<8x8xi1>, vector<8x8xf32>
    %cst_4 = arith.constant 0xFF800000 : f32
    %15 = vector.broadcast %cst_4 : f32 to vector<8x8xf32>
    %16 = arith.select %12, %15, %3 : vector<8x8xi1>, vector<8x8xf32>
    %cst_5 = arith.constant dense<0xFF800000> : vector<8xf32>
    %17 = vector.multi_reduction <maximumf>, %14, %cst_5 [1] : vector<8x8xf32> to vector<8xf32>
    %18 = vector.shape_cast %17 : vector<8xf32> to vector<8x1xf32>
    %19 = vector.broadcast %18 : vector<8x1xf32> to vector<8x8xf32>
    %20 = arith.subf %14, %19 : vector<8x8xf32>
    %21 = math.exp %20 : vector<8x8xf32>
    %cst_6 = arith.constant dense<0.000000e+00> : vector<8xf32>
    %22 = vector.multi_reduction <add>, %21, %cst_6 [1] : vector<8x8xf32> to vector<8xf32>
    %23 = vector.shape_cast %22 : vector<8xf32> to vector<8x1xf32>
    %24 = math.log %23 : vector<8x1xf32>
    %25 = vector.broadcast %24 : vector<8x1xf32> to vector<8x8xf32>
    %26 = arith.subf %20, %25 : vector<8x8xf32>
    %cst_7 = arith.constant dense<0xFF800000> : vector<8xf32>
    %27 = vector.multi_reduction <maximumf>, %16, %cst_7 [1] : vector<8x8xf32> to vector<8xf32>
    %28 = vector.shape_cast %27 : vector<8xf32> to vector<8x1xf32>
    %29 = vector.broadcast %28 : vector<8x1xf32> to vector<8x8xf32>
    %30 = arith.subf %16, %29 : vector<8x8xf32>
    %31 = math.exp %30 : vector<8x8xf32>
    %cst_8 = arith.constant dense<0.000000e+00> : vector<8xf32>
    %32 = vector.multi_reduction <add>, %31, %cst_8 [1] : vector<8x8xf32> to vector<8xf32>
    %33 = vector.shape_cast %32 : vector<8xf32> to vector<8x1xf32>
    %cst_9 = arith.constant 0.000000e+00 : f32
    %34 = vector.broadcast %cst_9 : f32 to vector<8x8xf32>
    %35 = arith.select %12, %34, %26 : vector<8x8xi1>, vector<8x8xf32>
    %36 = arith.mulf %31, %35 : vector<8x8xf32>
    %cst_10 = arith.constant dense<0.000000e+00> : vector<8xf32>
    %37 = vector.multi_reduction <add>, %36, %cst_10 [1] : vector<8x8xf32> to vector<8xf32>
    %38 = vector.shape_cast %37 : vector<8xf32> to vector<8x1xf32>
    %39 = arith.divf %38, %33 : vector<8x1xf32>
    %c0_11 = arith.constant 0 : index
    %40 = memref.load %arg5[%c0_11] : memref<2xf32, #tpu.memory_space<smem>>
    %41 = vector.shape_cast %39 : vector<8x1xf32> to vector<1x8x1xf32>
    %cst_12 = arith.constant dense<0.000000e+00> : vector<1xf32>
    %42 = vector.multi_reduction <add>, %41, %cst_12 [1, 2] : vector<1x8x1xf32> to vector<1xf32>
    %43 = vector.shape_cast %42 : vector<1xf32> to vector<1x1x1xf32>
    %44 = vector.extract %43[0, 0, 0] : f32 from vector<1x1x1xf32>
    %45 = arith.addf %40, %44 : f32
    %c0_13 = arith.constant 0 : index
    %46 = memref.load %arg5[%c0_13] : memref<2xf32, #tpu.memory_space<smem>>
    memref.store %45, %arg5[%c0_13] : memref<2xf32, #tpu.memory_space<smem>>
    %c1 = arith.constant 1 : index
    %47 = memref.load %arg5[%c1] : memref<2xf32, #tpu.memory_space<smem>>
    %cst_14 = arith.constant 8.000000e+00 : f32
    %48 = arith.addf %47, %cst_14 : f32
    %c1_15 = arith.constant 1 : index
    %49 = memref.load %arg5[%c1_15] : memref<2xf32, #tpu.memory_space<smem>>
    memref.store %48, %arg5[%c1_15] : memref<2xf32, #tpu.memory_space<smem>>
    %c0_16 = arith.constant 0 : index
    %50 = memref.load %arg5[%c0_16] : memref<2xf32, #tpu.memory_space<smem>>
    %c0_17 = arith.constant 0 : index
    %c0_18 = arith.constant 0 : index
    %c0_19 = arith.constant 0 : index
    %51 = memref.load %arg4[%c0_17, %c0_18, %c0_19] : memref<1x1x2xf32, #tpu.memory_space<smem>>
    memref.store %50, %arg4[%c0_17, %c0_18, %c0_19] : memref<1x1x2xf32, #tpu.memory_space<smem>>
    %c1_20 = arith.constant 1 : index
    %52 = memref.load %arg5[%c1_20] : memref<2xf32, #tpu.memory_space<smem>>
    %c0_21 = arith.constant 0 : index
    %c0_22 = arith.constant 0 : index
    %c1_23 = arith.constant 1 : index
    %53 = memref.load %arg4[%c0_21, %c0_22, %c1_23] : memref<1x1x2xf32, #tpu.memory_space<smem>>
    memref.store %52, %arg4[%c0_21, %c0_22, %c1_23] : memref<1x1x2xf32, #tpu.memory_space<smem>>
    return
  }
  func.func @transform_0(%arg0: i32, %arg1: i32) -> (i32, i32) {
    %c1_i32 = arith.constant 1 : i32
    %0 = arith.muli %arg0, %c1_i32 : i32
    %1 = arith.addi %0, %arg1 : i32
    %c0_i32 = arith.constant 0 : i32
    %c0_i32_0 = arith.constant 0 : i32
    return %1, %c0_i32 : i32, i32
  }
  func.func @transform_1(%arg0: i32, %arg1: i32) -> (i32, i32) {
    %c1_i32 = arith.constant 1 : i32
    %0 = arith.muli %arg0, %c1_i32 : i32
    %1 = arith.addi %0, %arg1 : i32
    %c0_i32 = arith.constant 0 : i32
    %c0_i32_0 = arith.constant 0 : i32
    return %1, %c0_i32 : i32, i32
  }
  func.func @transform_2(%arg0: i32, %arg1: i32) -> (i32, i32, i32) {
    %c0_i32 = arith.constant 0 : i32
    %c0_i32_0 = arith.constant 0 : i32
    %c0_i32_1 = arith.constant 0 : i32
    return %arg0, %c0_i32, %c0_i32_0 : i32, i32, i32
  }
}

</mosaic_0001>

<llo_original>
// kernel: tpu_custom_call.1
$region0: #{tpu_custom_call.1}
  #allocation0 [shape = 'u32[]', space=smem, size = 0x4, offset = 0x4, fixed_abs, tag = 'smem constant byte address 0x4 - core index']
  #allocation1 [shape = 'u32[144,128]{1,0:T(1,128)}', space=vmem, size = 0x12000, scoped, tag = 'internal scratch']
  #allocation2 [shape = 'f32[2]{0:T(128)}', space=smem, size = 0x200, scoped, tag = 'scratch operand']
  %s0 = inlined_call_operand.hbm [shape: f32[8,8], index: 0, kind: input, shape index: {}]
  %s1 = inlined_call_operand.hbm [shape: f32[8,8], index: 1, kind: input, shape index: {}]
  %s2 = inlined_call_operand.hbm [shape: f32[1,1,2], index: 2, kind: output, shape index: {}]
  %s3 = sld [smem:[#allocation0]]
  $region30: #{tpu_custom_call.1} parent=0
    _
  %s5 = ssub.s32 1, %s3
  %s6 = scalar_select 0, %s5, %s3
  $region1: #{tpu_custom_call.1} parent=0
    #allocation3 [shape = 'u8[4096]{0}', space=vmem, size = 0x1000, scoped, tag = 'input window, operand 0, single buffered']
    #allocation4 [shape = 's32[1]{0}', space=sflag, size = 0x4, scoped, tag = 'scoped memory for tpu_custom_call.1']
    #allocation5 [shape = 's32[1]{0}', space=sflag, size = 0x4, scoped, tag = 'scoped memory for tpu_custom_call.1']
    #allocation6 [shape = 'u8[4096]{0}', space=vmem, size = 0x1000, scoped, tag = 'input window, operand 1, single buffered']
    #allocation7 [shape = 's32[1]{0}', space=sflag, size = 0x4, scoped, tag = 'scoped memory for tpu_custom_call.1']
    #allocation8 [shape = 'u8[512]{0}', space=smem, size = 0x200, scoped, tag = 'output window, operand 0, single buffered']
    %7 = vsyncpa [#allocation4], 0
    %8 = vsyncpa [#allocation7], 0
    %9 = vsyncpa [#allocation5], 0
    // Predicated region
    $region2: #{tpu_custom_call.1} parent=1 // pred_check
      _
    $region3: #{tpu_custom_call.1} parent=1 // pred_check_branch
      %11 = sbr.rel (0) target = $region5
    $region4: #{tpu_custom_call.1} parent=1 // pred_region
      %s12 = sadd.s32 0, 0
      %s14 = ssub.s32 128, 128
      %15 = vsyncadd [#allocation4], %s14
      %s16 = smul.addr %s12, 128
      %s17 = scalar_lea.hbm %s0, %s16
      %s19 = sshll.u32 [#allocation3], 4
      %s20 = int_to_ptr.vmem [resolvable:$true] %s19
      %22 = dma.hbm_to_vmem [thread:$0]  %s17, 128, %s20, [#allocation4]
    $region5: #{tpu_custom_call.1} parent=1 // pred_fallthru
      _
    // Predicated region
    $region6: #{tpu_custom_call.1} parent=1 // pred_check
      _
    $region7: #{tpu_custom_call.1} parent=1 // pred_check_branch
      %24 = sbr.rel (0) target = $region9
    $region8: #{tpu_custom_call.1} parent=1 // pred_region
      %s25 = sadd.s32 0, 0
      %s27 = ssub.s32 128, 128
      %28 = vsyncadd [#allocation7], %s27
      %s29 = smul.addr %s25, 128
      %s30 = scalar_lea.hbm %s1, %s29
      %s32 = sshll.u32 [#allocation6], 4
      %s33 = int_to_ptr.vmem [resolvable:$true] %s32
      %35 = dma.hbm_to_vmem [thread:$0]  %s30, 128, %s33, [#allocation7]
    $region9: #{tpu_custom_call.1} parent=1 // pred_fallthru
      _
    // Predicated region
    $region10: #{tpu_custom_call.1} parent=1 // pred_check
      _
    $region11: #{tpu_custom_call.1} parent=1 // pred_check_branch
      %37 = sbr.rel (0) target = $region13
    $region12: #{tpu_custom_call.1} parent=1 // pred_region
      %38 = dma.done [#allocation4], 128
    $region13: #{tpu_custom_call.1} parent=1 // pred_fallthru
      _
    // Predicated region
    $region14: #{tpu_custom_call.1} parent=1 // pred_check
      _
    $region15: #{tpu_custom_call.1} parent=1 // pred_check_branch
      %40 = sbr.rel (0) target = $region17
    $region16: #{tpu_custom_call.1} parent=1 // pred_region
      %41 = dma.done [#allocation7], 128
    $region17: #{tpu_custom_call.1} parent=1 // pred_fallthru
      _
    %s42 = sadd.s32 0, 0
    %s43 = sadd.s32 0, 0
    %p44 = scmp.eq.s32.totalorder 0, 0
    // Predicated region
    $region18: #{tpu_custom_call.1} parent=1 // pred_check
      %p45 = pneg %p44
    $region19: #{tpu_custom_call.1} parent=1 // pred_check_branch
      %47 = sbr.rel (%p45) target = $region21
    $region20: #{tpu_custom_call.1} parent=1 // pred_region
      %s48 = scalar_lea.smem [#allocation2], 0
      %49 = sst [smem:[%s48]] 0.0
      %s50 = scalar_lea.smem [#allocation2], 1
      %51 = sst [smem:[%s50]] 0.0
    $region21: #{tpu_custom_call.1} parent=1 // pred_fallthru
      _
    %v52 = vld [vmem:[#allocation3] sm:$0xff]
    %v53 = vld [vmem:[#allocation6] sm:$0xff]
    %s54 = sadd.s32 0, 0
    %v55 = vlaneseq
    %v56 = vshrl.u32 %v55, 7
    %s57 = smul.u32 %s54, 8
    %v58 = vstv %s57
    %v59 = vadd.s32 %v56, %v58
    %v60 = vlaneseq
    %v61 = vand.u32 %v60, 127
    %vm62 = vcmp.eq.s32.totalorder %v59, %v61
    %v63 = vsel %vm62, -inf, %v53
    %v64 = vsel %vm62, -inf, %v52
    %vm65 = vcmask 64512
    %v66 = vsel %vm65, %v63, -inf
    %67 = vmax.xlane.f32.xlu0 %v66
    %v68 = vpop.xlane.xlu0 %67
    %v69 = vsub.f32 %v63, %v68
    %v70 = vmul.f32 %v69, 1.442695
    %v71 = vpow.pop %v70
    %v72 = vsel %vm65, %v71, 0.0
    %73 = vadd.xlane.f32.xlu0 %v72
    %v74 = vpop.xlane.xlu0 %73
    %v75 = vlog2.pop %v74
    %v76 = vmul.f32 %v75, 0.6931472
    %v77 = vsub.f32 %v69, %v76
    %v78 = vsel %vm65, %v64, -inf
    %79 = vmax.xlane.f32.xlu0 %v78
    %v80 = vpop.xlane.xlu0 %79
    %v81 = vsub.f32 %v64, %v80
    %v82 = vmul.f32 %v81, 1.442695
    %v83 = vpow.pop %v82
    %v84 = vsel %vm65, %v83, 0.0
    %85 = vadd.xlane.f32.xlu0 %v84
    %v86 = vpop.xlane.xlu0 %85
    %v87 = vsel %vm62, 0.0, %v77
    %v88 = vmul.f32 %v83, %v87
    %v89 = vsel %vm65, %v88, 0.0
    %90 = vadd.xlane.f32.xlu0 %v89
    %v91 = vpop.xlane.xlu0 %90
    %v92 = vrcp.pop %v86
    %v93 = vmul.f32 %v91, %v92
    %s94 = sld [smem:[#allocation2]]
    %vm95 = vcmask 7168
    %v96 = vsel %vm95, %v93, 0.0
    %97 = vadd.xlane.f32.xlu0 %v96
    %v98 = vpop.xlane.xlu0 %97
    %v99 = vrot.slane %v98, 4
    %v100 = vadd.f32 %v98, %v99
    %v101 = vrot.slane %v100, 2
    %v102 = vadd.f32 %v100, %v101
    %v103 = vrot.slane %v102, 1
    %v104 = vadd.f32 %v102, %v103
    %s105 = vtos %v104
    %s106 = sadd.f32 %s94, %s105
    %s107 = scalar_lea.smem [#allocation2], 0
    %108 = sst [smem:[%s107]] %s106
    %s109 = sld [smem:[#allocation2 + $0x1]]
    %s110 = sadd.f32 %s109, 8.0
    %s111 = scalar_lea.smem [#allocation2], 1
    %112 = sst [smem:[%s111]] %s110
    %s113 = sld [smem:[#allocation2]]
    %s114 = scalar_lea.smem [#allocation8], 0
    %115 = sst [smem:[%s114]] %s113
    %s116 = sld [smem:[#allocation2 + $0x1]]
    %s117 = scalar_lea.smem [#allocation8], 1
    %118 = sst [smem:[%s117]] %s116
    // Predicated region
    $region22: #{tpu_custom_call.1} parent=1 // pred_check
      _
    $region23: #{tpu_custom_call.1} parent=1 // pred_check_branch
      %120 = sbr.rel (0) target = $region25
    $region24: #{tpu_custom_call.1} parent=1 // pred_region
      %s122 = ssub.s32 16, 16
      %123 = vsyncadd [#allocation5], %s122
      %126 = dma.smem_to_hbm [#allocation8], 16, %s2, [#allocation5]
    $region25: #{tpu_custom_call.1} parent=1 // pred_fallthru
      _
    // Predicated region
    $region26: #{tpu_custom_call.1} parent=1 // pred_check
      _
    $region27: #{tpu_custom_call.1} parent=1 // pred_check_branch
      %128 = sbr.rel (0) target = $region29
    $region28: #{tpu_custom_call.1} parent=1 // pred_region
      %129 = dma.done [#allocation5], 16
    $region29: #{tpu_custom_call.1} parent=1 // pred_fallthru
      _
    %130 = sfence
    %131 = vsyncpa [#allocation4], 1
    %132 = vsyncpa [#allocation7], 1
    %133 = vsyncpa [#allocation5], 1

</llo_original>
